<compile_context>
chip_gen: v7x
topology: tpu7x:2x2x1
jax: 0.10.0
libtpu: 0.0.40
codegen_flags: <defaults>
</compile_context>

<pallas_src>
import jax
import jax.numpy as jnp
from jax.experimental import pallas as pl
from jax.experimental.pallas import tpu as pltpu


_LANE_CHOICES = (8192, 4096, 2048, 1024, 512, 256, 128)
_DEFAULT_BLOCK_BYTES = 2 << 20      # v5e / v6e: measured ~85%-of-roofline knee
_V7X_BLOCK_BYTES = 4 << 20          # v7x: ~2.3x HBM BW -> re-amortize step cost
_RAGGED_BLOCK_BYTES = 512 << 10     # 1-D fallback: conservative VMEM footprint
_VMEM_LIMIT_BYTES = 32 << 20


def _silu_kernel(x_ref, o_ref):
    # f32 compute everywhere; exact tanh identity -> single EUP op / element.
    xf = x_ref[...].astype(jnp.float32)
    o_ref[...] = (0.5 * xf * (1.0 + jnp.tanh(0.5 * xf))).astype(o_ref.dtype)


def _chip_params():
    """(target_block_bytes, tensorcore_count) for the local backend."""
    tbb, ntc = _DEFAULT_BLOCK_BYTES, 1
    try:
        kind = jax.devices()[0].device_kind.lower()
        if "v7" in kind or "tpu7" in kind:
            tbb, ntc = _V7X_BLOCK_BYTES, 2   # 2 TensorCores per chip
    except Exception:
        pass                                  # non-TPU / unknown: keep defaults
    return tbb, ntc


def _row_align(itemsize):
    # Sublane tile height: 8 rows (4-byte), 16 (2-byte), 32 (1-byte) dtypes.
    return max(8, 32 // max(1, itemsize))


def _pick_lanes(n, itemsize):
    """Widest lane count dividing n whose row count is sublane-aligned."""
    align = _row_align(itemsize)
    widest = None
    for lanes in _LANE_CHOICES:
        if n % lanes:
            continue
        if widest is None:
            widest = lanes
        if (n // lanes) % align == 0:
            return lanes                      # lane-dense AND sublane-dense
    return widest                             # tiny tensors: single block anyway


def _pick_block_rows(rows, lanes, itemsize, target_bytes, ntc):
    align = _row_align(itemsize)
    max_rows = max(align, (target_bytes // (lanes * itemsize)) // align * align)
    total_bytes = rows * lanes * itemsize
    if rows <= max_rows:
        # Whole slab fits one block.  Split in two only on multi-TC chips
        # (v7x) so both cores stream; on 1-TC chips a split is pure overhead.
        if ntc >= 2 and total_bytes >= (512 << 10) and rows % (2 * align) == 0:
            return rows // 2
        return rows
    # Prefer an exact divisor of `rows` (no masked boundary block).  On
    # multi-TC chips with a short grid, prefer one giving an even block count
    # so both cores get equal work.
    best = None
    for cand in range(max_rows, align - 1, -align):
        if rows % cand:
            continue
        if best is None:
            best = cand
        g = rows // cand
        if ntc < 2 or g > 8 or g % ntc == 0:
            return cand
    if best is not None:
        return best
    return max_rows   # non-divisible: Pallas masks the partial boundary block


def _silu_2d(x2d, target_bytes, ntc):
    rows, lanes = x2d.shape
    itemsize = jnp.dtype(x2d.dtype).itemsize
    block_rows = _pick_block_rows(rows, lanes, itemsize, target_bytes, ntc)
    grid = pl.cdiv(rows, block_rows)
    return pl.pallas_call(
        _silu_kernel,
        out_shape=jax.ShapeDtypeStruct(x2d.shape, x2d.dtype),
        grid_spec=pltpu.PrefetchScalarGridSpec(
            num_scalar_prefetch=0,
            grid=(grid,),
            in_specs=[pl.BlockSpec((block_rows, lanes), lambda i: (i, 0))],
            out_specs=pl.BlockSpec((block_rows, lanes), lambda i: (i, 0)),
        ),
        compiler_params=pltpu.CompilerParams(
            dimension_semantics=("parallel",),
            vmem_limit_bytes=_VMEM_LIMIT_BYTES,
        ),
    )(x2d)


def _silu_1d(flat, ntc):
    """Ragged fallback: stream the flat view with a masked partial tail block.

    No jnp.pad / trailing slice -> no extra HBM read+write passes.
    """
    del ntc  # grid is usually tiny here; megacore split not worth special-casing
    n = flat.shape[0]
    itemsize = jnp.dtype(flat.dtype).itemsize
    chunk = 8 * 128  # keep blocks a multiple of the (8, 128) vreg tile
    block = max(chunk, (_RAGGED_BLOCK_BYTES // itemsize) // chunk * chunk)
    if block >= n:
        block = n                   # single block == full array dims (legal)
        grid = 1
    else:
        grid = pl.cdiv(n, block)    # last block is partial -> masked stores
    return pl.pallas_call(
        _silu_kernel,
        out_shape=jax.ShapeDtypeStruct((n,), flat.dtype),
        grid_spec=pltpu.PrefetchScalarGridSpec(
            num_scalar_prefetch=0,
            grid=(grid,),
            in_specs=[pl.BlockSpec((block,), lambda i: (i,))],
            out_specs=pl.BlockSpec((block,), lambda i: (i,)),
        ),
        compiler_params=pltpu.CompilerParams(
            dimension_semantics=("parallel",),
            vmem_limit_bytes=_VMEM_LIMIT_BYTES,
        ),
    )(flat)


def silu_pallas(x):
    """SiLU(x) = x * sigmoid(x), elementwise.  Same shape & dtype as x."""
    orig_shape = x.shape
    n = x.size
    if n == 0:
        return x
    target_bytes, ntc = _chip_params()
    itemsize = jnp.dtype(x.dtype).itemsize

    lanes = _pick_lanes(n, itemsize)
    if lanes is not None:
        # Fast path: free reshape of the contiguous tensor into a lane-dense,
        # sublane-aligned 2-D slab.
        out2d = _silu_2d(x.reshape(n // lanes, lanes), target_bytes, ntc)
        return out2d.reshape(orig_shape)

    # Ragged size (n % 128 != 0): flat stream with in-kernel masked tail.
    out = _silu_1d(x.reshape(n), ntc)
    return out.reshape(orig_shape)


if __name__ == "__main__":
    def ref_silu(a):
        af = a.astype(jnp.float32)
        return (af * jax.nn.sigmoid(af)).astype(a.dtype)

    key = jax.random.PRNGKey(0)
    k0, k1, k2, k3, k4 = jax.random.split(key, 5)

    # Module contract is (N, *): small NCHW-like tensor.
    x = jax.random.normal(k0, (2, 4, 16, 16), dtype=jnp.float32)
    y = jax.block_until_ready(silu_pallas(x))
    assert y.shape == x.shape and y.dtype == x.dtype
    assert jnp.allclose(y, ref_silu(x), atol=1e-5, rtol=1e-5)

    # Ragged size -> 1-D fallback, single full block.
    x_r = jax.random.normal(k1, (2, 3, 5), dtype=jnp.float32)
    y_r = jax.block_until_ready(silu_pallas(x_r))
    assert jnp.allclose(y_r, ref_silu(x_r), atol=1e-5, rtol=1e-5)

    # Larger ragged size -> multi-block 1-D grid with masked partial tail.
    x_rb = jax.random.normal(k2, (1031, 769), dtype=jnp.float32)
    y_rb = jax.block_until_ready(silu_pallas(x_rb))
    assert jnp.allclose(y_rb, ref_silu(x_rb), atol=1e-5, rtol=1e-5)

    # bf16: computed internally in f32, rounded once at the output.
    x_b = jax.random.normal(k3, (4, 256), dtype=jnp.bfloat16)
    y_b = jax.block_until_ready(silu_pallas(x_b))
    assert y_b.dtype == jnp.bfloat16
    assert jnp.allclose(y_b.astype(jnp.float32),
                        ref_silu(x_b).astype(jnp.float32), atol=1e-2, rtol=1e-2)

    # Multi-block 2-D grid path (exercises the divisor / even-grid logic).
    x_g = jax.random.normal(k4, (1024, 1024), dtype=jnp.float32)
    y_g = jax.block_until_ready(silu_pallas(x_g))
    assert jnp.allclose(y_g, ref_silu(x_g), atol=1e-5, rtol=1e-5)

    print("KERNEL_OK")
</pallas_src>

<mosaic_0001>
module attributes {stable_mosaic.version = 11 : i64} {
  func.func @_silu_kernel(%arg0: i32, %arg1: memref<8x256xf32, #tpu.memory_space<vmem>>, %arg2: memref<8x256xf32, #tpu.memory_space<vmem>>) attributes {dimension_semantics = [#tpu.dimension_semantics<parallel>], iteration_bounds = array<i64: 1>, scalar_prefetch = 0 : i64, scratch_operands = 0 : i64, tpu.core_type = #tpu.core_type<tc>, window_params = [{transform_indices = @transform_0, window_bounds = array<i64: 8, 256>}, {transform_indices = @transform_1, window_bounds = array<i64: 8, 256>}]} {
    %c0 = arith.constant 0 : index
    %c0_0 = arith.constant 0 : index
    %0 = vector.load %arg1[%c0, %c0_0] : memref<8x256xf32, #tpu.memory_space<vmem>>, vector<8x256xf32>
    %cst = arith.constant 5.000000e-01 : f32
    %1 = vector.broadcast %cst : f32 to vector<8x256xf32>
    %2 = arith.mulf %1, %0 : vector<8x256xf32>
    %cst_1 = arith.constant 5.000000e-01 : f32
    %3 = vector.broadcast %cst_1 : f32 to vector<8x256xf32>
    %4 = arith.mulf %3, %0 : vector<8x256xf32>
    %5 = math.tanh %4 : vector<8x256xf32>
    %cst_2 = arith.constant 1.000000e+00 : f32
    %6 = vector.broadcast %cst_2 : f32 to vector<8x256xf32>
    %7 = arith.addf %6, %5 : vector<8x256xf32>
    %8 = arith.mulf %2, %7 : vector<8x256xf32>
    %c0_3 = arith.constant 0 : index
    %c0_4 = arith.constant 0 : index
    %9 = vector.load %arg2[%c0_3, %c0_4] : memref<8x256xf32, #tpu.memory_space<vmem>>, vector<8x256xf32>
    tpu.vector_store %arg2[%c0_3, %c0_4], %8 {strides = array<i32>} : memref<8x256xf32, #tpu.memory_space<vmem>>, vector<8x256xf32>,
    return
  }
  func.func @transform_0(%arg0: i32) -> (i32, i32) {
    %c0_i32 = arith.constant 0 : i32
    %c0_i32_0 = arith.constant 0 : i32
    return %arg0, %c0_i32 : i32, i32
  }
  func.func @transform_1(%arg0: i32) -> (i32, i32) {
    %c0_i32 = arith.constant 0 : i32
    %c0_i32_0 = arith.constant 0 : i32
    return %arg0, %c0_i32 : i32, i32
  }
}

</mosaic_0001>

<llo_original>
// kernel: tpu_custom_call.1
$region0: #{tpu_custom_call.1}
  #allocation0 [shape = 'u32[]', space=smem, size = 0x4, offset = 0x4, fixed_abs, tag = 'smem constant byte address 0x4 - core index']
  #allocation1 [shape = 'u32[144,128]{1,0:T(1,128)}', space=vmem, size = 0x12000, scoped, tag = 'internal scratch']
  %s0 = inlined_call_operand.hbm [shape: f32[8,256], index: 0, kind: input, shape index: {}]
  %s1 = inlined_call_operand.hbm [shape: f32[8,256], index: 1, kind: output, shape index: {}]
  %s2 = sld [smem:[#allocation0]]
  $region18: #{tpu_custom_call.1} parent=0
    _
  %s4 = ssub.s32 1, %s2
  %s5 = scalar_select 0, %s4, %s2
  $region1: #{tpu_custom_call.1} parent=0
    #allocation2 [shape = 'u8[8192]{0}', space=vmem, size = 0x2000, scoped, tag = 'input window, operand 0, single buffered']
    #allocation3 [shape = 's32[1]{0}', space=sflag, size = 0x4, scoped, tag = 'scoped memory for tpu_custom_call.1']
    #allocation4 [shape = 's32[1]{0}', space=sflag, size = 0x4, scoped, tag = 'scoped memory for tpu_custom_call.1']
    #allocation5 [shape = 'u8[8192]{0}', space=vmem, size = 0x2000, scoped, tag = 'output window, operand 0, single buffered']
    %6 = vsyncpa [#allocation3], 0
    %7 = vsyncpa [#allocation4], 0
    // Predicated region
    $region2: #{tpu_custom_call.1} parent=1 // pred_check
      _
    $region3: #{tpu_custom_call.1} parent=1 // pred_check_branch
      %9 = sbr.rel (0) target = $region5
    $region4: #{tpu_custom_call.1} parent=1 // pred_region
      %s11 = ssub.s32 256, 256
      %12 = vsyncadd [#allocation3], %s11
      %s14 = sshll.u32 [#allocation2], 4
      %s15 = int_to_ptr.vmem [resolvable:$true] %s14
      %17 = dma.hbm_to_vmem [thread:$0]  %s0, 256, %s15, [#allocation3]
    $region5: #{tpu_custom_call.1} parent=1 // pred_fallthru
      _
    // Predicated region
    $region6: #{tpu_custom_call.1} parent=1 // pred_check
      _
    $region7: #{tpu_custom_call.1} parent=1 // pred_check_branch
      %19 = sbr.rel (0) target = $region9
    $region8: #{tpu_custom_call.1} parent=1 // pred_region
      %20 = dma.done [#allocation3], 256
    $region9: #{tpu_custom_call.1} parent=1 // pred_fallthru
      _
    %v21 = vld [vmem:[#allocation2] sm:$0xff]
    %v22 = vld [vmem:[#allocation2 + $0x8] sm:$0xff]
    %v23 = vmul.f32 %v21, 0.5
    %v24 = vmul.f32 %v22, 0.5
    %v25 = vtanh.pop %v23
    %v26 = vtanh.pop %v24
    %v27 = vadd.f32 %v25, 1.0
    %v28 = vadd.f32 %v26, 1.0
    %v29 = vmul.f32 %v23, %v27
    %v30 = vmul.f32 %v24, %v28
    %31 = vst [vmem:[#allocation5] sm:$0xff] %v29
    %32 = vst [vmem:[#allocation5 + $0x8] sm:$0xff] %v30
    // Predicated region
    $region10: #{tpu_custom_call.1} parent=1 // pred_check
      _
    $region11: #{tpu_custom_call.1} parent=1 // pred_check_branch
      %34 = sbr.rel (0) target = $region13
    $region12: #{tpu_custom_call.1} parent=1 // pred_region
      %s36 = ssub.s32 256, 256
      %37 = vsyncadd [#allocation4], %s36
      %s39 = sshll.u32 [#allocation5], 4
      %s40 = int_to_ptr.vmem [resolvable:$true] %s39
      %42 = dma.vmem_to_hbm [thread:$0]  %s40, 256, %s1, [#allocation4]
    $region13: #{tpu_custom_call.1} parent=1 // pred_fallthru
      _
    // Predicated region
    $region14: #{tpu_custom_call.1} parent=1 // pred_check
      _
    $region15: #{tpu_custom_call.1} parent=1 // pred_check_branch
      %44 = sbr.rel (0) target = $region17
    $region16: #{tpu_custom_call.1} parent=1 // pred_region
      %45 = dma.done [#allocation4], 256
    $region17: #{tpu_custom_call.1} parent=1 // pred_fallthru
      _
    %46 = vsyncpa [#allocation3], 1
    %47 = vsyncpa [#allocation4], 1

</llo_original>
